<compile_context>
chip_gen: v5e
topology: v5e:2x2
jax: 0.10.0
libtpu: 0.0.40
codegen_flags: <defaults>
</compile_context>

<pallas_src>
import jax
import jax.numpy as jnp
from jax import lax
from jax.experimental import pallas as pl
from jax.experimental.pallas import tpu as pltpu


# ----------------------------------------------------------------------------
# Fused 2-layer ReLU-RNN + last-step classifier kernel (one time step per grid
# iteration; hidden state carried in VMEM scratch).
# ----------------------------------------------------------------------------
def rnn_classifier_kernel(x_ref, wih1_ref, whh1_ref, b1_ref,
                          wih2_ref, whh2_ref, b2_ref,
                          wc_ref, bc_ref, out_ref, h1_ref, h2_ref):
    t = pl.program_id(0)

    # h_0 = 0 for both layers (PyTorch default when h0 is not given).
    @pl.when(t == 0)
    def _():
        h1_ref[...] = jnp.zeros_like(h1_ref)
        h2_ref[...] = jnp.zeros_like(h2_ref)

    x_t = x_ref[0]            # (B, F)   current time step
    h1 = h1_ref[...]          # (B, H)
    h2 = h2_ref[...]          # (B, H)

    # Layer 1: h1 = relu(x_t @ Wih1 + h1 @ Whh1 + (b_ih1 + b_hh1))
    h1 = jnp.maximum(
        jnp.dot(x_t, wih1_ref[...], preferred_element_type=jnp.float32)
        + jnp.dot(h1, whh1_ref[...], preferred_element_type=jnp.float32)
        + b1_ref[...],
        0.0)

    # Layer 2: h2 = relu(h1 @ Wih2 + h2 @ Whh2 + (b_ih2 + b_hh2))
    h2 = jnp.maximum(
        jnp.dot(h1, wih2_ref[...], preferred_element_type=jnp.float32)
        + jnp.dot(h2, whh2_ref[...], preferred_element_type=jnp.float32)
        + b2_ref[...],
        0.0)

    h1_ref[...] = h1
    h2_ref[...] = h2

    # Classifier on the last time step's top-layer hidden state.
    @pl.when(t == pl.num_programs(0) - 1)
    def _():
        logits = (jnp.dot(h2, wc_ref[...], preferred_element_type=jnp.float32)
                  + bc_ref[...])
        out_ref[...] = logits.astype(out_ref.dtype)


def rnn_target_forward(x_btf, params):
    """x_btf: (B, T, 28) float32, batch_first like the PyTorch module."""
    B, T, F = x_btf.shape
    H = params["whh1"].shape[0]          # 128
    O = params["wc"].shape[1]            # 10

    # Time-major so each grid step's input block is (1, B, F) = full trailing dims.
    x_tbf = jnp.transpose(x_btf, (1, 0, 2))

    b1 = (params["bih1"] + params["bhh1"]).reshape(1, H)
    b2 = (params["bih2"] + params["bhh2"]).reshape(1, H)
    bc = params["bc"].reshape(1, O)

    const = lambda t: (0, 0)             # weights resident across all steps

    return pl.pallas_call(
        rnn_classifier_kernel,
        out_shape=jax.ShapeDtypeStruct((B, O), jnp.float32),
        grid=(T,),
        in_specs=[
            pl.BlockSpec((1, B, F), lambda t: (t, 0, 0)),   # x, one step / iter
            pl.BlockSpec((F, H), const),                    # W_ih layer 1
            pl.BlockSpec((H, H), const),                    # W_hh layer 1
            pl.BlockSpec((1, H), const),                    # b layer 1
            pl.BlockSpec((H, H), const),                    # W_ih layer 2
            pl.BlockSpec((H, H), const),                    # W_hh layer 2
            pl.BlockSpec((1, H), const),                    # b layer 2
            pl.BlockSpec((H, O), const),                    # classifier W
            pl.BlockSpec((1, O), const),                    # classifier b
        ],
        out_specs=pl.BlockSpec((B, O), const),              # written at last step
        scratch_shapes=[pltpu.VMEM((B, H), jnp.float32),    # h1 carried over time
                        pltpu.VMEM((B, H), jnp.float32)],   # h2 carried over time
        compiler_params=pltpu.CompilerParams(
            dimension_semantics=("arbitrary",)),            # recurrence => serial
    )(x_tbf, params["wih1"], params["whh1"], b1,
      params["wih2"], params["whh2"], b2, params["wc"], bc)


# ----------------------------------------------------------------------------
# Pure-JAX reference (mirrors torch.nn.RNN with relu + Linear)
# ----------------------------------------------------------------------------
def ref_forward(x_btf, params):
    B, _, _ = x_btf.shape
    H = params["whh1"].shape[0]
    h1 = jnp.zeros((B, H), jnp.float32)
    h2 = jnp.zeros((B, H), jnp.float32)

    def step(carry, x_t):
        h1, h2 = carry
        h1 = jnp.maximum(x_t @ params["wih1"] + params["bih1"]
                         + h1 @ params["whh1"] + params["bhh1"], 0.0)
        h2 = jnp.maximum(h1 @ params["wih2"] + params["bih2"]
                         + h2 @ params["whh2"] + params["bhh2"], 0.0)
        return (h1, h2), None

    (h1, h2), _ = lax.scan(step, (h1, h2), jnp.transpose(x_btf, (1, 0, 2)))
    return h2 @ params["wc"] + params["bc"]


def init_params(key, F=28, H=128, O=10):
    """Weights stored as (in, out), i.e. PyTorch's weight.T; same init scale
    as torch (uniform(-1/sqrt(H), 1/sqrt(H)))."""
    ks = jax.random.split(key, 10)
    s = 1.0 / jnp.sqrt(H)
    u = lambda k, shape: jax.random.uniform(k, shape, jnp.float32, -s, s)
    return {
        "wih1": u(ks[0], (F, H)), "whh1": u(ks[1], (H, H)),
        "bih1": u(ks[2], (H,)),   "bhh1": u(ks[3], (H,)),
        "wih2": u(ks[4], (H, H)), "whh2": u(ks[5], (H, H)),
        "bih2": u(ks[6], (H,)),   "bhh2": u(ks[7], (H,)),
        "wc":   u(ks[8], (H, O)), "bc":  u(ks[9], (O,)),
    }


if __name__ == "__main__":
    root = jax.random.PRNGKey(0)
    k_in, k_par = jax.random.split(root)

    B, T, F = 8, 28, 28        # MNIST-as-sequence style: 28 rows of 28 features
    x = jax.random.normal(k_in, (B, T, F), jnp.float32)
    params = init_params(k_par, F=F)

    out = jax.jit(rnn_target_forward)(x, params)
    out = jax.block_until_ready(out)
    assert out.shape == (B, 10) and out.dtype == jnp.float32

    ref = jax.block_until_ready(ref_forward(x, params))
    assert jnp.allclose(out, ref, atol=1e-3, rtol=1e-3), "mismatch vs reference"

    print("KERNEL_OK")
</pallas_src>

<mosaic_0001>
module attributes {stable_mosaic.version = 11 : i64} {
  func.func @rnn_classifier_kernel(%arg0: i32, %arg1: memref<1x8x28xf32, #tpu.memory_space<vmem>>, %arg2: memref<28x128xf32, #tpu.memory_space<vmem>>, %arg3: memref<128x128xf32, #tpu.memory_space<vmem>>, %arg4: memref<1x128xf32, #tpu.memory_space<vmem>>, %arg5: memref<128x128xf32, #tpu.memory_space<vmem>>, %arg6: memref<128x128xf32, #tpu.memory_space<vmem>>, %arg7: memref<1x128xf32, #tpu.memory_space<vmem>>, %arg8: memref<128x10xf32, #tpu.memory_space<vmem>>, %arg9: memref<1x10xf32, #tpu.memory_space<vmem>>, %arg10: memref<8x10xf32, #tpu.memory_space<vmem>>, %arg11: memref<8x128xf32, #tpu.memory_space<vmem>>, %arg12: memref<8x128xf32, #tpu.memory_space<vmem>>) attributes {dimension_semantics = [#tpu.dimension_semantics<arbitrary>], iteration_bounds = array<i64: 28>, scalar_prefetch = 0 : i64, scratch_operands = 2 : i64, tpu.core_type = #tpu.core_type<tc>, window_params = [{transform_indices = @transform_0, window_bounds = array<i64: 1, 8, 28>}, {pipeline_mode = #tpu.pipeline_mode<synchronous>, transform_indices = @transform_1, window_bounds = array<i64: 28, 128>}, {pipeline_mode = #tpu.pipeline_mode<synchronous>, transform_indices = @transform_2, window_bounds = array<i64: 128, 128>}, {pipeline_mode = #tpu.pipeline_mode<synchronous>, transform_indices = @transform_3, window_bounds = array<i64: 1, 128>}, {pipeline_mode = #tpu.pipeline_mode<synchronous>, transform_indices = @transform_4, window_bounds = array<i64: 128, 128>}, {pipeline_mode = #tpu.pipeline_mode<synchronous>, transform_indices = @transform_5, window_bounds = array<i64: 128, 128>}, {pipeline_mode = #tpu.pipeline_mode<synchronous>, transform_indices = @transform_6, window_bounds = array<i64: 1, 128>}, {pipeline_mode = #tpu.pipeline_mode<synchronous>, transform_indices = @transform_7, window_bounds = array<i64: 128, 10>}, {pipeline_mode = #tpu.pipeline_mode<synchronous>, transform_indices = @transform_8, window_bounds = array<i64: 1, 10>}, {pipeline_mode = #tpu.pipeline_mode<synchronous>, transform_indices = @transform_9, window_bounds = array<i64: 8, 10>}]} {
    %c0_i32 = arith.constant 0 : i32
    %0 = arith.cmpi eq, %arg0, %c0_i32 : i32
    %1 = arith.extui %0 : i1 to i32
    %c0_i32_0 = arith.constant 0 : i32
    %2 = arith.cmpi ne, %1, %c0_i32_0 : i32
    scf.if %2 {
      %cst_29 = arith.constant 0.000000e+00 : f32
      %32 = vector.broadcast %cst_29 : f32 to vector<8x128xf32>
      %c0_30 = arith.constant 0 : index
      %c0_31 = arith.constant 0 : index
      %33 = vector.load %arg11[%c0_30, %c0_31] : memref<8x128xf32, #tpu.memory_space<vmem>>, vector<8x128xf32>
      tpu.vector_store %arg11[%c0_30, %c0_31], %32 {strides = array<i32>} : memref<8x128xf32, #tpu.memory_space<vmem>>, vector<8x128xf32>,
      %cst_32 = arith.constant 0.000000e+00 : f32
      %34 = vector.broadcast %cst_32 : f32 to vector<8x128xf32>
      %c0_33 = arith.constant 0 : index
      %c0_34 = arith.constant 0 : index
      %35 = vector.load %arg12[%c0_33, %c0_34] : memref<8x128xf32, #tpu.memory_space<vmem>>, vector<8x128xf32>
      tpu.vector_store %arg12[%c0_33, %c0_34], %34 {strides = array<i32>} : memref<8x128xf32, #tpu.memory_space<vmem>>, vector<8x128xf32>,
    } else {
    }
    %c0 = arith.constant 0 : index
    %c0_1 = arith.constant 0 : index
    %c0_2 = arith.constant 0 : index
    %3 = vector.load %arg1[%c0, %c0_1, %c0_2] : memref<1x8x28xf32, #tpu.memory_space<vmem>>, vector<1x8x28xf32>
    %4 = vector.shape_cast %3 : vector<1x8x28xf32> to vector<8x28xf32>
    %c0_3 = arith.constant 0 : index
    %c0_4 = arith.constant 0 : index
    %5 = vector.load %arg11[%c0_3, %c0_4] : memref<8x128xf32, #tpu.memory_space<vmem>>, vector<8x128xf32>
    %c0_5 = arith.constant 0 : index
    %c0_6 = arith.constant 0 : index
    %6 = vector.load %arg12[%c0_5, %c0_6] : memref<8x128xf32, #tpu.memory_space<vmem>>, vector<8x128xf32>
    %c0_7 = arith.constant 0 : index
    %c0_8 = arith.constant 0 : index
    %7 = vector.load %arg2[%c0_7, %c0_8] : memref<28x128xf32, #tpu.memory_space<vmem>>, vector<28x128xf32>
    %cst = arith.constant dense<0.000000e+00> : vector<8x128xf32>
    %8 = tpu.matmul %4, %7, %cst {dimension_numbers = #tpu.dot_dimension_numbers<[1], [0], [0], [1], [0, 0, 1, 1], [], []>} : vector<8x28xf32>, vector<28x128xf32>, vector<8x128xf32> -> vector<8x128xf32>
    %c0_9 = arith.constant 0 : index
    %c0_10 = arith.constant 0 : index
    %9 = vector.load %arg3[%c0_9, %c0_10] : memref<128x128xf32, #tpu.memory_space<vmem>>, vector<128x128xf32>
    %cst_11 = arith.constant dense<0.000000e+00> : vector<8x128xf32>
    %10 = tpu.matmul %5, %9, %cst_11 {dimension_numbers = #tpu.dot_dimension_numbers<[1], [0], [0], [1], [0, 0, 1, 1], [], []>} : vector<8x128xf32>, vector<128x128xf32>, vector<8x128xf32> -> vector<8x128xf32>
    %11 = arith.addf %8, %10 : vector<8x128xf32>
    %c0_12 = arith.constant 0 : index
    %c0_13 = arith.constant 0 : index
    %12 = vector.load %arg4[%c0_12, %c0_13] : memref<1x128xf32, #tpu.memory_space<vmem>>, vector<1x128xf32>
    %13 = vector.broadcast %12 : vector<1x128xf32> to vector<8x128xf32>
    %14 = arith.addf %11, %13 : vector<8x128xf32>
    %cst_14 = arith.constant 0.000000e+00 : f32
    %15 = vector.broadcast %cst_14 : f32 to vector<8x128xf32>
    %16 = arith.maximumf %14, %15 : vector<8x128xf32>
    %c0_15 = arith.constant 0 : index
    %c0_16 = arith.constant 0 : index
    %17 = vector.load %arg5[%c0_15, %c0_16] : memref<128x128xf32, #tpu.memory_space<vmem>>, vector<128x128xf32>
    %cst_17 = arith.constant dense<0.000000e+00> : vector<8x128xf32>
    %18 = tpu.matmul %16, %17, %cst_17 {dimension_numbers = #tpu.dot_dimension_numbers<[1], [0], [0], [1], [0, 0, 1, 1], [], []>} : vector<8x128xf32>, vector<128x128xf32>, vector<8x128xf32> -> vector<8x128xf32>
    %c0_18 = arith.constant 0 : index
    %c0_19 = arith.constant 0 : index
    %19 = vector.load %arg6[%c0_18, %c0_19] : memref<128x128xf32, #tpu.memory_space<vmem>>, vector<128x128xf32>
    %cst_20 = arith.constant dense<0.000000e+00> : vector<8x128xf32>
    %20 = tpu.matmul %6, %19, %cst_20 {dimension_numbers = #tpu.dot_dimension_numbers<[1], [0], [0], [1], [0, 0, 1, 1], [], []>} : vector<8x128xf32>, vector<128x128xf32>, vector<8x128xf32> -> vector<8x128xf32>
    %21 = arith.addf %18, %20 : vector<8x128xf32>
    %c0_21 = arith.constant 0 : index
    %c0_22 = arith.constant 0 : index
    %22 = vector.load %arg7[%c0_21, %c0_22] : memref<1x128xf32, #tpu.memory_space<vmem>>, vector<1x128xf32>
    %23 = vector.broadcast %22 : vector<1x128xf32> to vector<8x128xf32>
    %24 = arith.addf %21, %23 : vector<8x128xf32>
    %cst_23 = arith.constant 0.000000e+00 : f32
    %25 = vector.broadcast %cst_23 : f32 to vector<8x128xf32>
    %26 = arith.maximumf %24, %25 : vector<8x128xf32>
    %c0_24 = arith.constant 0 : index
    %c0_25 = arith.constant 0 : index
    %27 = vector.load %arg11[%c0_24, %c0_25] : memref<8x128xf32, #tpu.memory_space<vmem>>, vector<8x128xf32>
    tpu.vector_store %arg11[%c0_24, %c0_25], %16 {strides = array<i32>} : memref<8x128xf32, #tpu.memory_space<vmem>>, vector<8x128xf32>,
    %c0_26 = arith.constant 0 : index
    %c0_27 = arith.constant 0 : index
    %28 = vector.load %arg12[%c0_26, %c0_27] : memref<8x128xf32, #tpu.memory_space<vmem>>, vector<8x128xf32>
    tpu.vector_store %arg12[%c0_26, %c0_27], %26 {strides = array<i32>} : memref<8x128xf32, #tpu.memory_space<vmem>>, vector<8x128xf32>,
    %c27_i32 = arith.constant 27 : i32
    %29 = arith.cmpi eq, %arg0, %c27_i32 : i32
    %30 = arith.extui %29 : i1 to i32
    %c0_i32_28 = arith.constant 0 : i32
    %31 = arith.cmpi ne, %30, %c0_i32_28 : i32
    scf.if %31 {
      %c0_29 = arith.constant 0 : index
      %c0_30 = arith.constant 0 : index
      %32 = vector.load %arg8[%c0_29, %c0_30] : memref<128x10xf32, #tpu.memory_space<vmem>>, vector<128x10xf32>
      %cst_31 = arith.constant dense<0.000000e+00> : vector<8x10xf32>
      %33 = tpu.matmul %26, %32, %cst_31 {dimension_numbers = #tpu.dot_dimension_numbers<[1], [0], [0], [1], [0, 0, 1, 1], [], []>} : vector<8x128xf32>, vector<128x10xf32>, vector<8x10xf32> -> vector<8x10xf32>
      %c0_32 = arith.constant 0 : index
      %c0_33 = arith.constant 0 : index
      %34 = vector.load %arg9[%c0_32, %c0_33] : memref<1x10xf32, #tpu.memory_space<vmem>>, vector<1x10xf32>
      %35 = vector.broadcast %34 : vector<1x10xf32> to vector<8x10xf32>
      %36 = arith.addf %33, %35 : vector<8x10xf32>
      %c0_34 = arith.constant 0 : index
      %c0_35 = arith.constant 0 : index
      %37 = vector.load %arg10[%c0_34, %c0_35] : memref<8x10xf32, #tpu.memory_space<vmem>>, vector<8x10xf32>
      tpu.vector_store %arg10[%c0_34, %c0_35], %36 {strides = array<i32>} : memref<8x10xf32, #tpu.memory_space<vmem>>, vector<8x10xf32>,
    } else {
    }
    return
  }
  func.func @transform_0(%arg0: i32) -> (i32, i32, i32) {
    %c0_i32 = arith.constant 0 : i32
    %c0_i32_0 = arith.constant 0 : i32
    %c0_i32_1 = arith.constant 0 : i32
    return %arg0, %c0_i32, %c0_i32_0 : i32, i32, i32
  }
  func.func @transform_1(%arg0: i32) -> (i32, i32) {
    %c0_i32 = arith.constant 0 : i32
    %c0_i32_0 = arith.constant 0 : i32
    %c0_i32_1 = arith.constant 0 : i32
    return %c0_i32, %c0_i32_0 : i32, i32
  }
  func.func @transform_2(%arg0: i32) -> (i32, i32) {
    %c0_i32 = arith.constant 0 : i32
    %c0_i32_0 = arith.constant 0 : i32
    %c0_i32_1 = arith.constant 0 : i32
    return %c0_i32, %c0_i32_0 : i32, i32
  }
  func.func @transform_3(%arg0: i32) -> (i32, i32) {
    %c0_i32 = arith.constant 0 : i32
    %c0_i32_0 = arith.constant 0 : i32
    %c0_i32_1 = arith.constant 0 : i32
    return %c0_i32, %c0_i32_0 : i32, i32
  }
  func.func @transform_4(%arg0: i32) -> (i32, i32) {
    %c0_i32 = arith.constant 0 : i32
    %c0_i32_0 = arith.constant 0 : i32
    %c0_i32_1 = arith.constant 0 : i32
    return %c0_i32, %c0_i32_0 : i32, i32
  }
  func.func @transform_5(%arg0: i32) -> (i32, i32) {
    %c0_i32 = arith.constant 0 : i32
    %c0_i32_0 = arith.constant 0 : i32
    %c0_i32_1 = arith.constant 0 : i32
    return %c0_i32, %c0_i32_0 : i32, i32
  }
  func.func @transform_6(%arg0: i32) -> (i32, i32) {
    %c0_i32 = arith.constant 0 : i32
    %c0_i32_0 = arith.constant 0 : i32
    %c0_i32_1 = arith.constant 0 : i32
    return %c0_i32, %c0_i32_0 : i32, i32
  }
  func.func @transform_7(%arg0: i32) -> (i32, i32) {
    %c0_i32 = arith.constant 0 : i32
    %c0_i32_0 = arith.constant 0 : i32
    %c0_i32_1 = arith.constant 0 : i32
    return %c0_i32, %c0_i32_0 : i32, i32
  }
  func.func @transform_8(%arg0: i32) -> (i32, i32) {
    %c0_i32 = arith.constant 0 : i32
    %c0_i32_0 = arith.constant 0 : i32
    %c0_i32_1 = arith.constant 0 : i32
    return %c0_i32, %c0_i32_0 : i32, i32
  }
  func.func @transform_9(%arg0: i32) -> (i32, i32) {
    %c0_i32 = arith.constant 0 : i32
    %c0_i32_0 = arith.constant 0 : i32
    %c0_i32_1 = arith.constant 0 : i32
    return %c0_i32, %c0_i32_0 : i32, i32
  }
}

</mosaic_0001>

<llo_original>
// kernel: rnn_target_forward.1
$region0: #{rnn_target_forward.1}
  #allocation0 [shape = 'u32[]', space=smem, size = 0x4, offset = 0x4, fixed_abs, tag = 'smem constant byte address 0x4 - core index']
  #allocation1 [shape = 'u32[72,128]{1,0:T(1,128)}', space=vmem, size = 0x9000, scoped, tag = 'internal scratch']
  #allocation2 [shape = 'f32[8,128]{1,0:T(8,128)}', space=vmem, size = 0x1000, scoped, tag = 'scratch operand']
  #allocation3 [shape = 'f32[8,128]{1,0:T(8,128)}', space=vmem, size = 0x1000, scoped, tag = 'scratch operand']
  %s0 = inlined_call_operand.hbm [shape: f32[28,8,28], index: 0, kind: input, shape index: {}]
  %s1 = inlined_call_operand.hbm [shape: f32[28,128], index: 1, kind: input, shape index: {}]
  %s2 = inlined_call_operand.vmem [shape: f32[128,128], index: 2, kind: input, shape index: {}]
  %s3 = inlined_call_operand.vmem [shape: f32[1,128], index: 3, kind: input, shape index: {}]
  %s4 = inlined_call_operand.hbm [shape: f32[128,128], index: 4, kind: input, shape index: {}]
  %s5 = inlined_call_operand.hbm [shape: f32[128,128], index: 5, kind: input, shape index: {}]
  %s6 = inlined_call_operand.vmem [shape: f32[1,128], index: 6, kind: input, shape index: {}]
  %s7 = inlined_call_operand.vmem [shape: f32[128,10], index: 7, kind: input, shape index: {}]
  %s8 = inlined_call_operand.vmem [shape: f32[1,10], index: 8, kind: input, shape index: {}]
  %s9 = inlined_call_operand.hbm [shape: f32[8,10], index: 9, kind: output, shape index: {}]
  %s10 = sld [smem:[#allocation0]]
  $region93: #{rnn_target_forward.1} parent=0
    _
  %s12 = ssub.s32 1, %s10
  %s13 = scalar_select 0, %s12, %s10
  $region1: #{rnn_target_forward.1} parent=0
    #allocation4 [shape = 'u8[8192]{0}', space=vmem, size = 0x2000, scoped, tag = 'input window, operand 0']
    #allocation5 [shape = 's32[2]{0}', space=sflag, size = 0x8, scoped, tag = 'scoped memory for rnn_target_forward.1']
    #allocation6 [shape = 's32[2]{0}', space=sflag, size = 0x8, scoped, tag = 'scoped memory for rnn_target_forward.1']
    #allocation7 [shape = 'u8[16384]{0}', space=vmem, size = 0x4000, scoped, tag = 'input window, operand 1, single buffered']
    #allocation8 [shape = 's32[1]{0}', space=sflag, size = 0x4, scoped, tag = 'scoped memory for rnn_target_forward.1']
    #allocation9 [shape = 'u8[65536]{0}', space=vmem, size = 0x10000, scoped, tag = 'input window, operand 4, single buffered']
    #allocation10 [shape = 'u8[65536]{0}', space=vmem, size = 0x10000, scoped, tag = 'input window, operand 5, single buffered']
    #allocation11 [shape = 's32[1]{0}', space=sflag, size = 0x4, scoped, tag = 'scoped memory for rnn_target_forward.1']
    #allocation12 [shape = 'u8[4096]{0}', space=vmem, size = 0x1000, scoped, tag = 'output window, operand 0, single buffered']
    %14 = vsyncpa [#allocation5], 0
    %s15 = scalar_lea.sflag [#allocation5], 1
    %16 = vsyncpa %s15, 0
    %17 = vsyncpa [#allocation8], 0
    %18 = vsyncpa [#allocation11], 0
    %19 = vsyncpa [#allocation6], 0
    loop: start=0, step=1, limit=30
    $region2: #{rnn_target_forward.1} parent=1 // loop_pre_header
      _
    $region3: #{rnn_target_forward.1} parent=1 // loop_header
      %s21 = sphi 0, %s25
      %p22 = scmp.ge.s32.totalorder %s21, 30
      %s31 = sphi 0, %s33
      %s34 = sphi 0, %s31
      %s35 = sphi 0, %s34
      %s51 = sphi 0, %s35
      %s55 = sphi 0, %s55
      %s57 = sphi 0, %s55
      %s58 = sphi 0, %s57
      %s72 = sphi 0, %s58
      %s76 = sphi 0, %s76
      %s78 = sphi 0, %s76
      %s79 = sphi 0, %s78
      %s93 = sphi 0, %s79
      %s97 = sphi 0, %s97
      %s99 = sphi 0, %s97
      %s100 = sphi 0, %s99
      %s114 = sphi 0, %s100
      %s118 = sphi 0, %s118
      %s120 = sphi 0, %s118
      %s121 = sphi 0, %s120
      %s135 = sphi 0, %s121
      %s139 = sphi 0, %s139
      %s141 = sphi 0, %s139
      %s142 = sphi 0, %s141
      %s156 = sphi 0, %s142
      %s160 = sphi 0, %s160
      %s162 = sphi 0, %s160
      %s163 = sphi 0, %s162
      %s177 = sphi 0, %s163
      %s181 = sphi 0, %s181
      %s183 = sphi 0, %s181
      %s184 = sphi 0, %s183
      %s198 = sphi 0, %s184
      %s202 = sphi 0, %s202
      %s204 = sphi 0, %s202
      %s205 = sphi 0, %s204
      %s219 = sphi 0, %s205
      %s223 = sphi 0, %s223
      %s225 = sphi 0, %s223
      %s226 = sphi 0, %s225
      %s240 = sphi 0, %s226
    $region4: #{rnn_target_forward.1} parent=1 // loop_header_branch
      %24 = sbr.rel (%p22) target = $region8
    $region5: #{rnn_target_forward.1} parent=1 // loop_body
      %s26 = ssub.s32 %s21, 1
      %s27 = ssub.s32 %s21, 2
      %s28 = sadd.s32 %s21, 1
      %s29 = ssub.s32 %s21, %s28
      %p30 = scmp.eq.s32.totalorder %s29, 0
      %s32 = sadd.s32 %s31, 1
      %s33 = scalar_select %p30, %s31, %s32
      %p36 = pneg %p30
      %p37 = scmp.eq.s32.totalorder %s21, 27
      %p38 = por %p36, %p37
      %p39 = scmp.ne.s32.totalorder %s31, %s34
      %p40 = scmp.eq.s32.totalorder %s21, 0
      %p41 = por %p39, %p40
      %p42 = scmp.ne.s32.totalorder %s31, %s34
      %p43 = scmp.eq.s32.totalorder %s26, 27
      %p44 = por %p42, %p43
      %p45 = scmp.ne.s32.totalorder %s34, %s35
      %p46 = scmp.eq.s32.totalorder %s26, 0
      %p47 = por %p45, %p46
      %p48 = scmp.ne.s32.totalorder %s34, %s35
      %p49 = scmp.eq.s32.totalorder %s27, 27
      %p50 = por %p48, %p49
      %p52 = scmp.ne.s32.totalorder %s35, %s51
      %p53 = scmp.eq.s32.totalorder %s27, 0
      %p54 = por %p52, %p53
      %s56 = sadd.s32 %s55, 1
      %p59 = scmp.eq.s32.totalorder %s21, 27
      %p60 = scmp.ne.s32.totalorder %s55, %s57
      %p61 = scmp.eq.s32.totalorder %s21, 0
      %p62 = por %p60, %p61
      %p63 = scmp.ne.s32.totalorder %s55, %s57
      %p64 = scmp.eq.s32.totalorder %s26, 27
      %p65 = por %p63, %p64
      %p66 = scmp.ne.s32.totalorder %s57, %s58
      %p67 = scmp.eq.s32.totalorder %s26, 0
      %p68 = por %p66, %p67
      %p69 = scmp.ne.s32.totalorder %s57, %s58
      %p70 = scmp.eq.s32.totalorder %s27, 27
      %p71 = por %p69, %p70
      %p73 = scmp.ne.s32.totalorder %s58, %s72
      %p74 = scmp.eq.s32.totalorder %s27, 0
      %p75 = por %p73, %p74
      %s77 = sadd.s32 %s76, 1
      %p80 = scmp.eq.s32.totalorder %s21, 27
      %p81 = scmp.ne.s32.totalorder %s76, %s78
      %p82 = scmp.eq.s32.totalorder %s21, 0
      %p83 = por %p81, %p82
      %p84 = scmp.ne.s32.totalorder %s76, %s78
      %p85 = scmp.eq.s32.totalorder %s26, 27
      %p86 = por %p84, %p85
      %p87 = scmp.ne.s32.totalorder %s78, %s79
      %p88 = scmp.eq.s32.totalorder %s26, 0
      %p89 = por %p87, %p88
      %p90 = scmp.ne.s32.totalorder %s78, %s79
      %p91 = scmp.eq.s32.totalorder %s27, 27
      %p92 = por %p90, %p91
      %p94 = scmp.ne.s32.totalorder %s79, %s93
      %p95 = scmp.eq.s32.totalorder %s27, 0
      %p96 = por %p94, %p95
      %s98 = sadd.s32 %s97, 1
      %p101 = scmp.eq.s32.totalorder %s21, 27
      %p102 = scmp.ne.s32.totalorder %s97, %s99
      %p103 = scmp.eq.s32.totalorder %s21, 0
      %p104 = por %p102, %p103
      %p105 = scmp.ne.s32.totalorder %s97, %s99
      %p106 = scmp.eq.s32.totalorder %s26, 27
      %p107 = por %p105, %p106
      %p108 = scmp.ne.s32.totalorder %s99, %s100
      %p109 = scmp.eq.s32.totalorder %s26, 0
      %p110 = por %p108, %p109
      %p111 = scmp.ne.s32.totalorder %s99, %s100
      %p112 = scmp.eq.s32.totalorder %s27, 27
      %p113 = por %p111, %p112
      %p115 = scmp.ne.s32.totalorder %s100, %s114
      %p116 = scmp.eq.s32.totalorder %s27, 0
      %p117 = por %p115, %p116
      %s119 = sadd.s32 %s118, 1
      %p122 = scmp.eq.s32.totalorder %s21, 27
      %p123 = scmp.ne.s32.totalorder %s118, %s120
      %p124 = scmp.eq.s32.totalorder %s21, 0
      %p125 = por %p123, %p124
      %p126 = scmp.ne.s32.totalorder %s118, %s120
      %p127 = scmp.eq.s32.totalorder %s26, 27
      %p128 = por %p126, %p127
      %p129 = scmp.ne.s32.totalorder %s120, %s121
      %p130 = scmp.eq.s32.totalorder %s26, 0
      %p131 = por %p129, %p130
      %p132 = scmp.ne.s32.totalorder %s120, %s121
      %p133 = scmp.eq.s32.totalorder %s27, 27
      %p134 = por %p132, %p133
      %p136 = scmp.ne.s32.totalorder %s121, %s135
      %p137 = scmp.eq.s32.totalorder %s27, 0
      %p138 = por %p136, %p137
      %s140 = sadd.s32 %s139, 1
      %p143 = scmp.eq.s32.totalorder %s21, 27
      %p144 = scmp.ne.s32.totalorder %s139, %s141
      %p145 = scmp.eq.s32.totalorder %s21, 0
      %p146 = por %p144, %p145
      %p147 = scmp.ne.s32.totalorder %s139, %s141
      %p148 = scmp.eq.s32.totalorder %s26, 27
      %p149 = por %p147, %p148
      %p150 = scmp.ne.s32.totalorder %s141, %s142
      %p151 = scmp.eq.s32.totalorder %s26, 0
      %p152 = por %p150, %p151
      %p153 = scmp.ne.s32.totalorder %s141, %s142
      %p154 = scmp.eq.s32.totalorder %s27, 27
      %p155 = por %p153, %p154
      %p157 = scmp.ne.s32.totalorder %s142, %s156
      %p158 = scmp.eq.s32.totalorder %s27, 0
      %p159 = por %p157, %p158
      %s161 = sadd.s32 %s160, 1
      %p164 = scmp.eq.s32.totalorder %s21, 27
      %p165 = scmp.ne.s32.totalorder %s160, %s162
      %p166 = scmp.eq.s32.totalorder %s21, 0
      %p167 = por %p165, %p166
      %p168 = scmp.ne.s32.totalorder %s160, %s162
      %p169 = scmp.eq.s32.totalorder %s26, 27
      %p170 = por %p168, %p169
      %p171 = scmp.ne.s32.totalorder %s162, %s163
      %p172 = scmp.eq.s32.totalorder %s26, 0
      %p173 = por %p171, %p172
      %p174 = scmp.ne.s32.totalorder %s162, %s163
      %p175 = scmp.eq.s32.totalorder %s27, 27
      %p176 = por %p174, %p175
      %p178 = scmp.ne.s32.totalorder %s163, %s177
      %p179 = scmp.eq.s32.totalorder %s27, 0
      %p180 = por %p178, %p179
      %s182 = sadd.s32 %s181, 1
      %p185 = scmp.eq.s32.totalorder %s21, 27
      %p186 = scmp.ne.s32.totalorder %s181, %s183
      %p187 = scmp.eq.s32.totalorder %s21, 0
      %p188 = por %p186, %p187
      %p189 = scmp.ne.s32.totalorder %s181, %s183
      %p190 = scmp.eq.s32.totalorder %s26, 27
      %p191 = por %p189, %p190
      %p192 = scmp.ne.s32.totalorder %s183, %s184
      %p193 = scmp.eq.s32.totalorder %s26, 0
      %p194 = por %p192, %p193
      %p195 = scmp.ne.s32.totalorder %s183, %s184
      %p196 = scmp.eq.s32.totalorder %s27, 27
      %p197 = por %p195, %p196
      %p199 = scmp.ne.s32.totalorder %s184, %s198
      %p200 = scmp.eq.s32.totalorder %s27, 0
      %p201 = por %p199, %p200
      %s203 = sadd.s32 %s202, 1
      %p206 = scmp.eq.s32.totalorder %s21, 27
      %p207 = scmp.ne.s32.totalorder %s202, %s204
      %p208 = scmp.eq.s32.totalorder %s21, 0
      %p209 = por %p207, %p208
      %p210 = scmp.ne.s32.totalorder %s202, %s204
      %p211 = scmp.eq.s32.totalorder %s26, 27
      %p212 = por %p210, %p211
      %p213 = scmp.ne.s32.totalorder %s204, %s205
      %p214 = scmp.eq.s32.totalorder %s26, 0
      %p215 = por %p213, %p214
      %p216 = scmp.ne.s32.totalorder %s204, %s205
      %p217 = scmp.eq.s32.totalorder %s27, 27
      %p218 = por %p216, %p217
      %p220 = scmp.ne.s32.totalorder %s205, %s219
      %p221 = scmp.eq.s32.totalorder %s27, 0
      %p222 = por %p220, %p221
      %s224 = sadd.s32 %s223, 1
      %p227 = scmp.eq.s32.totalorder %s21, 27
      %p228 = scmp.ne.s32.totalorder %s223, %s225
      %p229 = scmp.eq.s32.totalorder %s21, 0
      %p230 = por %p228, %p229
      %p231 = scmp.ne.s32.totalorder %s223, %s225
      %p232 = scmp.eq.s32.totalorder %s26, 27
      %p233 = por %p231, %p232
      %p234 = scmp.ne.s32.totalorder %s225, %s226
      %p235 = scmp.eq.s32.totalorder %s26, 0
      %p236 = por %p234, %p235
      %p237 = scmp.ne.s32.totalorder %s225, %s226
      %p238 = scmp.eq.s32.totalorder %s27, 27
      %p239 = por %p237, %p238
      %p241 = scmp.ne.s32.totalorder %s226, %s240
      %p242 = scmp.eq.s32.totalorder %s27, 0
      %p243 = por %p241, %p242
      %p244 = scmp.le.s32.totalorder 1, %s21
      %p245 = scmp.lt.s32.totalorder %s21, 29
      %p246 = pnand %p244, %p245
      %p247 = pneg %p246
      // Predicated region
      $region9: #{rnn_target_forward.1} parent=5 // pred_check
        _
      $region10: #{rnn_target_forward.1} parent=5 // pred_check_branch
        %249 = sbr.rel (%p246) target = $region12
      $region11: #{rnn_target_forward.1} parent=5 // pred_region
        %s250 = ssub.s32 %s21, 1
        // Predicated region
        $region13: #{rnn_target_forward.1} parent=11 // pred_check
          %p251 = pneg %p68
        $region14: #{rnn_target_forward.1} parent=11 // pred_check_branch
          %253 = sbr.rel (%p251) target = $region16
        $region15: #{rnn_target_forward.1} parent=11 // pred_region
          %255 = vsyncadd [#allocation8], 0
          %s256 = sshll.u32 %s1, 4
          %s257 = int_to_ptr.hbm [resolvable:$true] %s256
          %s258 = sshll.u32 [#allocation7], 4
          %s259 = int_to_ptr.vmem [resolvable:$true] %s258
          %264 = dma.hbm_to_vmem [thread:$0]  %s257, 512, %s259, [#allocation8], 128, 128, 8
        $region16: #{rnn_target_forward.1} parent=11 // pred_fallthru
          _
        // Predicated region
        $region17: #{rnn_target_forward.1} parent=11 // pred_check
          %p265 = pneg %p89
        $region18: #{rnn_target_forward.1} parent=11 // pred_check_branch
          %267 = sbr.rel (%p265) target = $region20
        $region19: #{rnn_target_forward.1} parent=11 // pred_region
          _
        $region20: #{rnn_target_forward.1} parent=11 // pred_fallthru
          _
        // Predicated region
        $region21: #{rnn_target_forward.1} parent=11 // pred_check
          %p268 = pneg %p110
        $region22: #{rnn_target_forward.1} parent=11 // pred_check_branch
          %270 = sbr.rel (%p268) target = $region24
        $region23: #{rnn_target_forward.1} parent=11 // pred_region
          _
        $region24: #{rnn_target_forward.1} parent=11 // pred_fallthru
          _
        // Predicated region
        $region25: #{rnn_target_forward.1} parent=11 // pred_check
          %p271 = pneg %p131
        $region26: #{rnn_target_forward.1} parent=11 // pred_check_branch
          %273 = sbr.rel (%p271) target = $region28
        $region27: #{rnn_target_forward.1} parent=11 // pred_region
          %275 = vsyncadd [#allocation8], 0
          %s276 = sshll.u32 %s4, 4
          %s277 = int_to_ptr.hbm [resolvable:$true] %s276
          %s278 = sshll.u32 [#allocation9], 4
          %s279 = int_to_ptr.vmem [resolvable:$true] %s278
          %284 = dma.hbm_to_vmem [thread:$0]  %s277, 2048, %s279, [#allocation8], 128, 128, 8
        $region28: #{rnn_target_forward.1} parent=11 // pred_fallthru
          _
        // Predicated region
        $region29: #{rnn_target_forward.1} parent=11 // pred_check
          %p285 = pneg %p152
        $region30: #{rnn_target_forward.1} parent=11 // pred_check_branch
          %287 = sbr.rel (%p285) target = $region32
        $region31: #{rnn_target_forward.1} parent=11 // pred_region
          %289 = vsyncadd [#allocation11], 0
          %s290 = sshll.u32 %s5, 4
          %s291 = int_to_ptr.hbm [resolvable:$true] %s290
          %s292 = sshll.u32 [#allocation10], 4
          %s293 = int_to_ptr.vmem [resolvable:$true] %s292
          %298 = dma.hbm_to_vmem [thread:$0]  %s291, 2048, %s293, [#allocation11], 128, 128, 8
        $region32: #{rnn_target_forward.1} parent=11 // pred_fallthru
          _
        // Predicated region
        $region33: #{rnn_target_forward.1} parent=11 // pred_check
          %p299 = pneg %p173
        $region34: #{rnn_target_forward.1} parent=11 // pred_check_branch
          %301 = sbr.rel (%p299) target = $region36
        $region35: #{rnn_target_forward.1} parent=11 // pred_region
          _
        $region36: #{rnn_target_forward.1} parent=11 // pred_fallthru
          _
        // Predicated region
        $region37: #{rnn_target_forward.1} parent=11 // pred_check
          %p302 = pneg %p194
        $region38: #{rnn_target_forward.1} parent=11 // pred_check_branch
          %304 = sbr.rel (%p302) target = $region40
        $region39: #{rnn_target_forward.1} parent=11 // pred_region
          _
        $region40: #{rnn_target_forward.1} parent=11 // pred_fallthru
          _
        // Predicated region
        $region41: #{rnn_target_forward.1} parent=11 // pred_check
          %p305 = pneg %p215
        $region42: #{rnn_target_forward.1} parent=11 // pred_check_branch
          %307 = sbr.rel (%p305) target = $region44
        $region43: #{rnn_target_forward.1} parent=11 // pred_region
          _
        $region44: #{rnn_target_forward.1} parent=11 // pred_fallthru
          _
      $region12: #{rnn_target_forward.1} parent=5 // pred_fallthru
        _
      %p308 = scmp.lt.s32.totalorder %s21, 28
      // Predicated region
      $region45: #{rnn_target_forward.1} parent=5 // pred_check
        %p309 = pneg %p308
      $region46: #{rnn_target_forward.1} parent=5 // pred_check_branch
        %311 = sbr.rel (%p309) target = $region48
      $region47: #{rnn_target_forward.1} parent=5 // pred_region
        // Predicated region
        $region49: #{rnn_target_forward.1} parent=47 // pred_check
          %p312 = pneg %p41
        $region50: #{rnn_target_forward.1} parent=47 // pred_check_branch
          %314 = sbr.rel (%p312) target = $region52
        $region51: #{rnn_target_forward.1} parent=47 // pred_region
          %s315 = sand.u32 %s31, 1
          %s316 = scalar_lea.sflag [#allocation5], %s315
          %s317 = sand.u32 %s31, 1
          %s318 = smul.addr %s317, 8
          %s319 = scalar_lea.vmem [#allocation4], %s318
          %321 = vsyncadd %s316, 0
          %s322 = smul.addr %s21, 8
          %s323 = scalar_lea.hbm %s0, %s322
          %s325 = sshll.u32 %s323, 4
          %s326 = int_to_ptr.hbm [resolvable:$true] %s325
          %s327 = sshll.u32 %s319, 4
          %s328 = int_to_ptr.vmem [resolvable:$true] %s327
          %330 = dma.hbm_to_vmem [thread:$0]  %s326, 128, %s328, %s316
        $region52: #{rnn_target_forward.1} parent=47 // pred_fallthru
          _
      $region48: #{rnn_target_forward.1} parent=5 // pred_fallthru
        _
      %p331 = scmp.le.s32.totalorder 1, %s21
      %p332 = scmp.lt.s32.totalorder %s21, 29
      %p333 = pnand %p331, %p332
      %p334 = pneg %p333
      // Predicated region
      $region53: #{rnn_target_forward.1} parent=5 // pred_check
        _
      $region54: #{rnn_target_forward.1} parent=5 // pred_check_branch
        %336 = sbr.rel (%p333) target = $region56
      $region55: #{rnn_target_forward.1} parent=5 // pred_region
        %s337 = ssub.s32 %s21, 1
        %s338 = sand.u32 %s34, 1
        %s339 = scalar_lea.sflag [#allocation5], %s338
        %s340 = sand.u32 %s34, 1
        %s341 = smul.addr %s340, 8
        %s342 = scalar_lea.vmem [#allocation4], %s341
        // Predicated region
        $region57: #{rnn_target_forward.1} parent=55 // pred_check
          %p343 = pneg %p47
        $region58: #{rnn_target_forward.1} parent=55 // pred_check_branch
          %345 = sbr.rel (%p343) target = $region60
        $region59: #{rnn_target_forward.1} parent=55 // pred_region
          %347 = dma.done %s339, 128
        $region60: #{rnn_target_forward.1} parent=55 // pred_fallthru
          _
        // Predicated region
        $region61: #{rnn_target_forward.1} parent=55 // pred_check
          %p348 = pneg %p68
        $region62: #{rnn_target_forward.1} parent=55 // pred_check_branch
          %350 = sbr.rel (%p348) target = $region64
        $region63: #{rnn_target_forward.1} parent=55 // pred_region
          %352 = dma.done [#allocation8], 512
        $region64: #{rnn_target_forward.1} parent=55 // pred_fallthru
          _
        // Predicated region
        $region65: #{rnn_target_forward.1} parent=55 // pred_check
          %p353 = pneg %p131
        $region66: #{rnn_target_forward.1} parent=55 // pred_check_branch
          %355 = sbr.rel (%p353) target = $region68
        $region67: #{rnn_target_forward.1} parent=55 // pred_region
          %357 = dma.done [#allocation8], 2048
        $region68: #{rnn_target_forward.1} parent=55 // pred_fallthru
          _
        // Predicated region
        $region69: #{rnn_target_forward.1} parent=55 // pred_check
          %p358 = pneg %p152
        $region70: #{rnn_target_forward.1} parent=55 // pred_check_branch
          %360 = sbr.rel (%p358) target = $region72
        $region71: #{rnn_target_forward.1} parent=55 // pred_region
          %362 = dma.done [#allocation11], 2048
        $region72: #{rnn_target_forward.1} parent=55 // pred_fallthru
          _
        %s363 = sand.u32 %s34, 1
        %s364 = scalar_lea.sflag [#allocation5], %s363
        %s365 = sand.u32 %s34, 1
        %s366 = smul.addr %s365, 8
        %s367 = scalar_lea.vmem [#allocation4], %s366
        %p368 = pneg %p47
        %p369 = pneg %p44
        %p370 = pneg %p68
        %p371 = pneg %p65
        %p372 = pneg %p89
        %p373 = pneg %p86
        %p374 = pneg %p110
        %p375 = pneg %p107
        %p376 = pneg %p131
        %p377 = pneg %p128
        %p378 = pneg %p152
        %p379 = pneg %p149
        %p380 = pneg %p173
        %p381 = pneg %p170
        %p382 = pneg %p194
        %p383 = pneg %p191
        %p384 = pneg %p215
        %p385 = pneg %p212
        %p386 = pneg %p236
        %p387 = pneg %p233
        %p388 = scmp.eq.s32.totalorder %s26, 0
        // Predicated region
        $region73: #{rnn_target_forward.1} parent=55 // pred_check
          %p389 = pneg %p388
        $region74: #{rnn_target_forward.1} parent=55 // pred_check_branch
          %391 = sbr.rel (%p389) target = $region76
        $region75: #{rnn_target_forward.1} parent=55 // pred_region
          %392 = vst [vmem:[#allocation2] sm:$0xff] 0.0
          %393 = vst [vmem:[#allocation3] sm:$0xff] 0.0
        $region76: #{rnn_target_forward.1} parent=55 // pred_fallthru
          _
        %v394 = vld [vmem:[%s342] sm:$0xff]
        %v395 = vld [vmem:[#allocation2] sm:$0xff]
        %v396 = vld [vmem:[#allocation3] sm:$0xff]
        %v397 = vld [vmem:[#allocation7] sm:$0xff]
        %v398 = vld [vmem:[#allocation7 + $0x8] sm:$0xff]
        %v399 = vld [vmem:[#allocation7 + $0x10] sm:$0xff]
        %v400 = vld [vmem:[#allocation7 + $0x18] sm:$0xf]
        %v401 = vld [vmem:[%s2] sm:$0xff]
        %v402 = vld [vmem:[%s2 + $0x8] sm:$0xff]
        %v403 = vld [vmem:[%s2 + $0x10] sm:$0xff]
        %v404 = vld [vmem:[%s2 + $0x18] sm:$0xff]
        %v405 = vld [vmem:[%s2 + $0x20] sm:$0xff]
        %v406 = vld [vmem:[%s2 + $0x28] sm:$0xff]
        %v407 = vld [vmem:[%s2 + $0x30] sm:$0xff]
        %v408 = vld [vmem:[%s2 + $0x38] sm:$0xff]
        %v409 = vld [vmem:[%s2 + $0x40] sm:$0xff]
        %v410 = vld [vmem:[%s2 + $0x48] sm:$0xff]
        %v411 = vld [vmem:[%s2 + $0x50] sm:$0xff]
        %v412 = vld [vmem:[%s2 + $0x58] sm:$0xff]
        %v413 = vld [vmem:[%s2 + $0x60] sm:$0xff]
        %v414 = vld [vmem:[%s2 + $0x68] sm:$0xff]
        %v415 = vld [vmem:[%s2 + $0x70] sm:$0xff]
        %v416 = vld [vmem:[%s2 + $0x78] sm:$0xff]
        %417 = vmatpush.msra.mxu0 %v416
        %418 = vmatpush.msra.mxu0 %v415
        %419 = vmatpush.msra.mxu0 %v414
        %420 = vmatpush.msra.mxu0 %v413
        %421 = vmatpush.msra.mxu0 %v412
        %422 = vmatpush.msra.mxu0 %v411
        %423 = vmatpush.msra.mxu0 %v410
        %424 = vmatpush.msra.mxu0 %v409
        %425 = vmatpush.msra.mxu0 %v408
        %426 = vmatpush.msra.mxu0 %v407
        %427 = vmatpush.msra.mxu0 %v406
        %428 = vmatpush.msra.mxu0 %v405
        %429 = vmatpush.msra.mxu0 %v404
        %430 = vmatpush.msra.mxu0 %v403
        %431 = vmatpush.msra.mxu0 %v402
        %432 = vmatpush.msra.mxu0 %v401
        %433 = vmatmul.f32.gmra.mxu0 %v395
        %v434 = vpop.f32.mrf.mxu0
        %v435 = vadd.f32 0.0, %v434
        %436 = vdwg.mxu0
        %vm437 = vcmask 228352
        %v439 = vsel %vm437, %v394, 0
        %vm441 = vcmask 1043456
        %v443 = vsel %vm441, %v400, 0
        %445 = vmatpush.msra.mxu0 0.0
        %446 = vmatpush.msra.mxu0 0.0
        %447 = vmatpush.msra.mxu0 0.0
        %448 = vmatpush.msra.mxu0 0.0
        %449 = vmatpush.msra.mxu0 0.0
        %450 = vmatpush.msra.mxu0 0.0
        %451 = vmatpush.msra.mxu0 0.0
        %452 = vmatpush.msra.mxu0 0.0
        %453 = vmatpush.msra.mxu0 0.0
        %454 = vmatpush.msra.mxu0 0.0
        %455 = vmatpush.msra.mxu0 0.0
        %456 = vmatpush.msra.mxu0 0.0
        %457 = vmatpush.msra.mxu0 %v443
        %458 = vmatpush.msra.mxu0 %v399
        %459 = vmatpush.msra.mxu0 %v398
        %460 = vmatpush.msra.mxu0 %v397
        %461 = vmatmul.f32.gmra.mxu0 %v439
        %v462 = vpop.f32.mrf.mxu0
        %v463 = vadd.f32 %v435, %v462
        %464 = vdwg.mxu0
        %v465 = vld [vmem:[%s3] sm:$0x1]
        %v467 = vperm.slane %v465, 0
        %v469 = vadd.f32 %v463, %v467
        %v470 = vmax.f32 %v469, 0.0
        %v471 = vld [vmem:[#allocation9] sm:$0xff]
        %v472 = vld [vmem:[#allocation9 + $0x8] sm:$0xff]
        %v473 = vld [vmem:[#allocation9 + $0x10] sm:$0xff]
        %v474 = vld [vmem:[#allocation9 + $0x18] sm:$0xff]
        %v475 = vld [vmem:[#allocation9 + $0x20] sm:$0xff]
        %v476 = vld [vmem:[#allocation9 + $0x28] sm:$0xff]
        %v477 = vld [vmem:[#allocation9 + $0x30] sm:$0xff]
        %v478 = vld [vmem:[#allocation9 + $0x38] sm:$0xff]
        %v479 = vld [vmem:[#allocation9 + $0x40] sm:$0xff]
        %v480 = vld [vmem:[#allocation9 + $0x48] sm:$0xff]
        %v481 = vld [vmem:[#allocation9 + $0x50] sm:$0xff]
        %v482 = vld [vmem:[#allocation9 + $0x58] sm:$0xff]
        %v483 = vld [vmem:[#allocation9 + $0x60] sm:$0xff]
        %v484 = vld [vmem:[#allocation9 + $0x68] sm:$0xff]
        %v485 = vld [vmem:[#allocation9 + $0x70] sm:$0xff]
        %v486 = vld [vmem:[#allocation9 + $0x78] sm:$0xff]
        %v487 = vld [vmem:[#allocation10] sm:$0xff]
        %v488 = vld [vmem:[#allocation10 + $0x8] sm:$0xff]
        %v489 = vld [vmem:[#allocation10 + $0x10] sm:$0xff]
        %v490 = vld [vmem:[#allocation10 + $0x18] sm:$0xff]
        %v491 = vld [vmem:[#allocation10 + $0x20] sm:$0xff]
        %v492 = vld [vmem:[#allocation10 + $0x28] sm:$0xff]
        %v493 = vld [vmem:[#allocation10 + $0x30] sm:$0xff]
        %v494 = vld [vmem:[#allocation10 + $0x38] sm:$0xff]
        %v495 = vld [vmem:[#allocation10 + $0x40] sm:$0xff]
        %v496 = vld [vmem:[#allocation10 + $0x48] sm:$0xff]
        %v497 = vld [vmem:[#allocation10 + $0x50] sm:$0xff]
        %v498 = vld [vmem:[#allocation10 + $0x58] sm:$0xff]
        %v499 = vld [vmem:[#allocation10 + $0x60] sm:$0xff]
        %v500 = vld [vmem:[#allocation10 + $0x68] sm:$0xff]
        %v501 = vld [vmem:[#allocation10 + $0x70] sm:$0xff]
        %v502 = vld [vmem:[#allocation10 + $0x78] sm:$0xff]
        %503 = vmatpush.msra.mxu0 %v502
        %504 = vmatpush.msra.mxu0 %v501
        %505 = vmatpush.msra.mxu0 %v500
        %506 = vmatpush.msra.mxu0 %v499
        %507 = vmatpush.msra.mxu0 %v498
        %508 = vmatpush.msra.mxu0 %v497
        %509 = vmatpush.msra.mxu0 %v496
        %510 = vmatpush.msra.mxu0 %v495
        %511 = vmatpush.msra.mxu0 %v494
        %512 = vmatpush.msra.mxu0 %v493
        %513 = vmatpush.msra.mxu0 %v492
        %514 = vmatpush.msra.mxu0 %v491
        %515 = vmatpush.msra.mxu0 %v490
        %516 = vmatpush.msra.mxu0 %v489
        %517 = vmatpush.msra.mxu0 %v488
        %518 = vmatpush.msra.mxu0 %v487
        %519 = vmatmul.f32.gmra.mxu0 %v396
        %v520 = vpop.f32.mrf.mxu0
        %v521 = vadd.f32 0.0, %v520
        %522 = vdwg.mxu0
        %523 = vmatpush.msra.mxu0 %v486
        %524 = vmatpush.msra.mxu0 %v485
        %525 = vmatpush.msra.mxu0 %v484
        %526 = vmatpush.msra.mxu0 %v483
        %527 = vmatpush.msra.mxu0 %v482
        %528 = vmatpush.msra.mxu0 %v481
        %529 = vmatpush.msra.mxu0 %v480
        %530 = vmatpush.msra.mxu0 %v479
        %531 = vmatpush.msra.mxu0 %v478
        %532 = vmatpush.msra.mxu0 %v477
        %533 = vmatpush.msra.mxu0 %v476
        %534 = vmatpush.msra.mxu0 %v475
        %535 = vmatpush.msra.mxu0 %v474
        %536 = vmatpush.msra.mxu0 %v473
        %537 = vmatpush.msra.mxu0 %v472
        %538 = vmatpush.msra.mxu0 %v471
        %539 = vmatmul.f32.gmra.mxu0 %v470
        %v540 = vpop.f32.mrf.mxu0
        %v541 = vadd.f32 %v521, %v540
        %542 = vdwg.mxu0
        %v543 = vld [vmem:[%s6] sm:$0x1]
        %v545 = vperm.slane %v543, 0
        %v547 = vadd.f32 %v541, %v545
        %v548 = vmax.f32 %v547, 0.0
        %549 = vst [vmem:[#allocation2] sm:$0xff] %v470
        %550 = vst [vmem:[#allocation3] sm:$0xff] %v548
        %p551 = scmp.eq.s32.totalorder %s26, 27
        // Predicated region
        $region77: #{rnn_target_forward.1} parent=55 // pred_check
          %p552 = pneg %p551
        $region78: #{rnn_target_forward.1} parent=55 // pred_check_branch
          %554 = sbr.rel (%p552) target = $region80
        $region79: #{rnn_target_forward.1} parent=55 // pred_region
          %v555 = vld [vmem:[%s7] sm:$0xff]
          %v556 = vld [vmem:[%s7 + $0x8] sm:$0xff]
          %v557 = vld [vmem:[%s7 + $0x10] sm:$0xff]
          %v558 = vld [vmem:[%s7 + $0x18] sm:$0xff]
          %v559 = vld [vmem:[%s7 + $0x20] sm:$0xff]
          %v560 = vld [vmem:[%s7 + $0x28] sm:$0xff]
          %v561 = vld [vmem:[%s7 + $0x30] sm:$0xff]
          %v562 = vld [vmem:[%s7 + $0x38] sm:$0xff]
          %v563 = vld [vmem:[%s7 + $0x40] sm:$0xff]
          %v564 = vld [vmem:[%s7 + $0x48] sm:$0xff]
          %v565 = vld [vmem:[%s7 + $0x50] sm:$0xff]
          %v566 = vld [vmem:[%s7 + $0x58] sm:$0xff]
          %v567 = vld [vmem:[%s7 + $0x60] sm:$0xff]
          %v568 = vld [vmem:[%s7 + $0x68] sm:$0xff]
          %v569 = vld [vmem:[%s7 + $0x70] sm:$0xff]
          %v570 = vld [vmem:[%s7 + $0x78] sm:$0xff]
          %v571 = vld [vmem:[%s8] sm:$0x1]
          %v573 = vperm.slane %v571, 0
          %575 = vmatpush.msra.mxu0 %v570
          %576 = vmatpush.msra.mxu0 %v569
          %577 = vmatpush.msra.mxu0 %v568
          %578 = vmatpush.msra.mxu0 %v567
          %579 = vmatpush.msra.mxu0 %v566
          %580 = vmatpush.msra.mxu0 %v565
          %581 = vmatpush.msra.mxu0 %v564
          %582 = vmatpush.msra.mxu0 %v563
          %583 = vmatpush.msra.mxu0 %v562
          %584 = vmatpush.msra.mxu0 %v561
          %585 = vmatpush.msra.mxu0 %v560
          %586 = vmatpush.msra.mxu0 %v559
          %587 = vmatpush.msra.mxu0 %v558
          %588 = vmatpush.msra.mxu0 %v557
          %589 = vmatpush.msra.mxu0 %v556
          %590 = vmatpush.msra.mxu0 %v555
          %591 = vmatmul.f32.gmra.mxu0 %v548
          %v592 = vpop.f32.mrf.mxu0
          %v593 = vadd.f32 %v573, %v592
          %594 = vdwg.mxu0
          %vm595 = vcmask 80896
          %596 = vst.msk [vmem:[#allocation12] sm:$0xff] %vm595, %v593
        $region80: #{rnn_target_forward.1} parent=55 // pred_fallthru
          _
        // Predicated region
        $region81: #{rnn_target_forward.1} parent=55 // pred_check
          %p597 = pneg %p233
        $region82: #{rnn_target_forward.1} parent=55 // pred_check_branch
          %599 = sbr.rel (%p597) target = $region84
        $region83: #{rnn_target_forward.1} parent=55 // pred_region
          %601 = vsyncadd [#allocation6], 0
          %s603 = sshll.u32 [#allocation12], 4
          %s604 = int_to_ptr.vmem [resolvable:$true] %s603
          %s605 = sshll.u32 %s9, 4
          %s606 = int_to_ptr.hbm [resolvable:$true] %s605
          %608 = dma.vmem_to_hbm [thread:$0]  %s604, 128, %s606, [#allocation6]
        $region84: #{rnn_target_forward.1} parent=55 // pred_fallthru
          _
        // Predicated region
        $region85: #{rnn_target_forward.1} parent=55 // pred_check
          %p609 = pneg %p233
        $region86: #{rnn_target_forward.1} parent=55 // pred_check_branch
          %611 = sbr.rel (%p609) target = $region88
        $region87: #{rnn_target_forward.1} parent=55 // pred_region
          %613 = dma.done [#allocation6], 128
        $region88: #{rnn_target_forward.1} parent=55 // pred_fallthru
          _
      $region56: #{rnn_target_forward.1} parent=5 // pred_fallthru
        _
      %p614 = scmp.le.s32.totalorder 2, %s21
      // Predicated region
      $region89: #{rnn_target_forward.1} parent=5 // pred_check
        %p615 = pneg %p614
      $region90: #{rnn_target_forward.1} parent=5 // pred_check_branch
        %617 = sbr.rel (%p615) target = $region92
      $region91: #{rnn_target_forward.1} parent=5 // pred_region
        %s618 = ssub.s32 %s21, 2
      $region92: #{rnn_target_forward.1} parent=5 // pred_fallthru
        _
    $region6: #{rnn_target_forward.1} parent=1 // loop_footer
      %s25 = sadd.s32 1, %s21
    $region7: #{rnn_target_forward.1} parent=1 // loop_footer_branch
      %20 = sbr.rel target = $region3
    $region8: #{rnn_target_forward.1} parent=1 // loop_exit
      _
    %619 = vsyncpa [#allocation5], 1
    %s620 = scalar_lea.sflag [#allocation5], 1
    %621 = vsyncpa %s620, 1
    %622 = vsyncpa [#allocation8], 1
    %623 = vsyncpa [#allocation11], 1
    %624 = vsyncpa [#allocation6], 1
    %s625 = scalar_lea.sflag [#allocation6], 1
    %626 = vsyncpa %s625, 1

</llo_original>
